<compile_context>
chip_gen: v7x
topology: tpu7x:2x2x1
jax: 0.10.0
libtpu: 0.0.40
codegen_flags: <defaults>
</compile_context>

<pallas_src>
import jax
import jax.numpy as jnp
from jax import lax
from jax.experimental import pallas as pl
from jax.experimental.pallas import tpu as pltpu

BN_EPS = 1e-5
IN_FEATS = 310
H1 = 128
H2 = 64
H2_PAD = 128        # layer-2 width padded to a full lane tile
CHUNK_MAX = 512     # batch rows per pipelined block


def _make_kernel(batch, chunk, batch_pad):
    """Build the 3-phase kernel for a given (true batch, chunk rows, padded batch)."""
    inv_b = 1.0 / float(batch)   # BN stats always divide by the TRUE batch size

    def kernel(x_ref, w1_ref, w2_ref, bn_ref, o_ref, h1_ref, st_ref):
        # x_ref : (chunk, 310)  f32   (only meaningful in phase 0)
        # w1_ref: (310, 128)    bf16
        # w2_ref: (128, 128)    bf16  (cols 64..127 are zero)
        # bn_ref: (8, 128)      f32   rows: 0=gamma1 1=beta1 2=gamma2(pad 0) 3=beta2(pad 0)
        # o_ref : (chunk, 128)  f32   (written in phase 2 only)
        # h1_ref: (batch_pad, 128) bf16  persistent scratch (raw Linear-1 output)
        # st_ref: (8, 128) f32  rows: 0=sum1 1=sumsq1 2=sum2 3=sumsq2
        #                             4=scale1 5=shift1 6=scale2 7=shift2
        p = pl.program_id(0)
        c = pl.program_id(1)
        row0 = pl.multiple_of(c * chunk, chunk)

        def bn1_relu(h1_f32):
            return jnp.maximum(h1_f32 * st_ref[4:5, :] + st_ref[5:6, :], 0.0)

        def matmul2(a_f32):
            return jnp.dot(a_f32.astype(jnp.bfloat16), w2_ref[...],
                           preferred_element_type=jnp.float32)

        # ---------------- phase 0: Linear1 + layer-1 batch statistics ----------------
        @pl.when(p == 0)
        def _phase0():
            @pl.when(c == 0)
            def _():
                st_ref[...] = jnp.zeros_like(st_ref)

            h = jnp.dot(x_ref[...].astype(jnp.bfloat16), w1_ref[...],
                        preferred_element_type=jnp.float32)            # (chunk, 128)
            h_b = h.astype(jnp.bfloat16)
            h1_ref[pl.ds(row0, chunk), :] = h_b                        # stash for phases 1/2
            hf = h_b.astype(jnp.float32)                               # stats of what we normalize
            # Zero-padded batch rows produce exactly-zero h rows -> contribute 0 here.
            st_ref[0:1, :] += jnp.sum(hf, axis=0, keepdims=True)
            st_ref[1:2, :] += jnp.sum(hf * hf, axis=0, keepdims=True)

        # ---------- phase 1: finalize BN1, Linear2, layer-2 batch statistics ----------
        @pl.when(p == 1)
        def _phase1():
            @pl.when(c == 0)
            def _():
                m1 = st_ref[0:1, :] * inv_b
                q1 = st_ref[1:2, :] * inv_b
                var1 = jnp.maximum(q1 - m1 * m1, 0.0)                  # biased batch variance
                scale1 = bn_ref[0:1, :] * lax.rsqrt(var1 + BN_EPS)     # gamma / sqrt(var+eps)
                st_ref[4:5, :] = scale1
                st_ref[5:6, :] = bn_ref[1:2, :] - m1 * scale1          # beta - mean*scale

            h1 = h1_ref[pl.ds(row0, chunk), :].astype(jnp.float32)
            h2 = matmul2(bn1_relu(h1))                                 # (chunk, 128)
            if batch_pad > batch:                                      # mask padded batch rows
                rid = lax.broadcasted_iota(jnp.int32, (chunk, 1), 0) + row0
                h2 = jnp.where(rid < batch, h2, 0.0)
            st_ref[2:3, :] += jnp.sum(h2, axis=0, keepdims=True)
            st_ref[3:4, :] += jnp.sum(h2 * h2, axis=0, keepdims=True)

        # ------------- phase 2: finalize BN2, recompute h2, write output -------------
        @pl.when(p == 2)
        def _phase2():
            @pl.when(c == 0)
            def _():
                m2 = st_ref[2:3, :] * inv_b
                q2 = st_ref[3:4, :] * inv_b
                var2 = jnp.maximum(q2 - m2 * m2, 0.0)
                scale2 = bn_ref[2:3, :] * lax.rsqrt(var2 + BN_EPS)
                st_ref[6:7, :] = scale2
                st_ref[7:8, :] = bn_ref[3:4, :] - m2 * scale2

            h1 = h1_ref[pl.ds(row0, chunk), :].astype(jnp.float32)
            h2 = matmul2(bn1_relu(h1))                                 # bit-identical to phase 1
            o_ref[...] = jnp.maximum(h2 * st_ref[6:7, :] + st_ref[7:8, :], 0.0)

    return kernel


def prepare_params(w1, b1, g1, be1, w2, b2, g2, be2):
    """Pack PyTorch-equivalent params into the kernel layout.

    Linear biases b1/b2 are discarded: with training-mode BatchNorm directly after each
    Linear, the bias is removed exactly by the batch-mean subtraction.
    """
    del b1, b2
    w1p = w1.astype(jnp.bfloat16)                                          # (310, 128)
    w2p = jnp.pad(w2, ((0, 0), (0, H2_PAD - H2))).astype(jnp.bfloat16)     # (128, 128)
    bn = jnp.zeros((8, 128), jnp.float32)
    bn = bn.at[0, :].set(g1)
    bn = bn.at[1, :].set(be1)
    bn = bn.at[2, :H2].set(g2)        # padded lanes stay 0 -> padded outputs normalize to 0
    bn = bn.at[3, :H2].set(be2)
    return w1p, w2p, bn


def seedbase2_forward(x, packed_params, *, chunk_rows=CHUNK_MAX):
    """x: any shape with leading batch dim whose trailing dims flatten to 310."""
    w1p, w2p, bn = packed_params
    B = x.shape[0]
    x2d = x.reshape(B, IN_FEATS).astype(jnp.float32)    # matches the module's .float()

    if B <= chunk_rows:
        chunk, n_chunks, b_pad = B, 1, B
    else:
        chunk = chunk_rows
        n_chunks = pl.cdiv(B, chunk)
        b_pad = n_chunks * chunk
        if b_pad != B:
            # Zero rows contribute exactly 0 to layer-1 sums and are masked for layer 2.
            # (Batches that are a multiple of chunk_rows avoid this extra HBM pass.)
            x2d = jnp.pad(x2d, ((0, b_pad - B), (0, 0)))

    kernel = _make_kernel(B, chunk, b_pad)

    x_map = lambda p, c: (jnp.where(p == 0, c, n_chunks - 1), 0)   # stream x exactly once
    o_map = lambda p, c: (jnp.where(p == 2, c, 0), 0)              # write out in phase 2 only
    fixed = lambda p, c: (0, 0)

    grid_spec = pltpu.PrefetchScalarGridSpec(
        num_scalar_prefetch=0,
        grid=(3, n_chunks),
        in_specs=[
            pl.BlockSpec((chunk, IN_FEATS), x_map),    # x   (f32 raw rows)
            pl.BlockSpec((IN_FEATS, H1), fixed),       # w1  (bf16)
            pl.BlockSpec((H1, H2_PAD), fixed),         # w2  (bf16, lane-padded)
            pl.BlockSpec((8, 128), fixed),             # packed BN gamma/beta (f32)
        ],
        out_specs=pl.BlockSpec((chunk, H2_PAD), o_map),
        scratch_shapes=[
            pltpu.VMEM((b_pad, H1), jnp.bfloat16),     # resident raw Linear-1 output
            pltpu.VMEM((8, 128), jnp.float32),         # stats / fused BN scale+shift
        ],
    )

    # VMEM footprint: double-buffered x/out blocks + resident h1 + params + temporaries.
    vmem_bytes = (2 * chunk * IN_FEATS * 4 + 2 * chunk * H2_PAD * 4
                  + b_pad * H1 * 2 + IN_FEATS * H1 * 2 + H1 * H2_PAD * 2
                  + 8 * 128 * 8 + 6 * chunk * H1 * 4)
    # Generous but always valid on v7x (64 MiB physical VMEM) as well as v5e/v6e.
    vmem_limit = int(min(max(2 * vmem_bytes, 32 << 20), 48 << 20))

    cost = pl.CostEstimate(
        flops=2 * b_pad * IN_FEATS * H1 + 2 * (2 * b_pad * H1 * H2_PAD),
        transcendentals=2 * 128,
        bytes_accessed=(b_pad * IN_FEATS * 4 + b_pad * H2_PAD * 4
                        + IN_FEATS * H1 * 2 + H1 * H2_PAD * 2 + 8 * 128 * 4),
    )

    out_full = pl.pallas_call(
        kernel,
        out_shape=jax.ShapeDtypeStruct((b_pad, H2_PAD), jnp.float32),
        grid_spec=grid_spec,
        compiler_params=pltpu.CompilerParams(
            dimension_semantics=("arbitrary", "arbitrary"),
            vmem_limit_bytes=vmem_limit),
        cost_estimate=cost,
    )(x2d, w1p, w2p, bn)

    return out_full[:B, :H2]


def seedbase2_reference(x, raw_params):
    """Pure-JAX fp32 reference of the PyTorch module (training-mode BatchNorm)."""
    w1, b1, g1, be1, w2, b2, g2, be2 = raw_params
    h = x.reshape(x.shape[0], IN_FEATS).astype(jnp.float32) @ w1 + b1
    h = (h - h.mean(0)) * lax.rsqrt(h.var(0) + BN_EPS) * g1 + be1
    h = jnp.maximum(h, 0.0)
    h2 = h @ w2 + b2
    h2 = (h2 - h2.mean(0)) * lax.rsqrt(h2.var(0) + BN_EPS) * g2 + be2
    return jnp.maximum(h2, 0.0)


def init_params(key):
    """PyTorch-default-style init (Linear: U(-1/sqrt(fan_in), 1/sqrt(fan_in));
    BatchNorm: gamma=1, beta=0). Weights stored (in_features, out_features)."""
    k1, k2, k3, k4 = jax.random.split(key, 4)
    bound1 = 1.0 / jnp.sqrt(310.0)
    w1 = jax.random.uniform(k1, (IN_FEATS, H1), jnp.float32, -bound1, bound1)
    b1 = jax.random.uniform(k2, (H1,), jnp.float32, -bound1, bound1)
    g1 = jnp.ones((H1,), jnp.float32)
    be1 = jnp.zeros((H1,), jnp.float32)

    bound2 = 1.0 / jnp.sqrt(128.0)
    w2 = jax.random.uniform(k3, (H1, H2), jnp.float32, -bound2, bound2)
    b2 = jax.random.uniform(k4, (H2,), jnp.float32, -bound2, bound2)
    g2 = jnp.ones((H2,), jnp.float32)
    be2 = jnp.zeros((H2,), jnp.float32)
    return (w1, b1, g1, be1, w2, b2, g2, be2)


if __name__ == "__main__":
    key = jax.random.PRNGKey(0)
    pkey, xkey, xkey2 = jax.random.split(key, 3)
    raw_params = init_params(pkey)
    packed = prepare_params(*raw_params)

    fwd = jax.jit(seedbase2_forward)

    # SEED-like EEG feature input: (batch, 62 channels, 5 bands) -> flattens to 310.
    B = 8
    x = jax.random.normal(xkey, (B, 62, 5), dtype=jnp.float32)
    out = jax.block_until_ready(fwd(x, packed))
    ref = seedbase2_reference(x, raw_params)
    assert out.shape == (B, H2) and out.dtype == jnp.float32
    assert bool(jnp.all(jnp.isfinite(out)))
    # Loose tolerance: bf16 MXU operands vs fp32 reference, BN over only 8 samples.
    assert float(jnp.max(jnp.abs(out - ref))) < 0.5

    # Also exercise the chunked/pipelined + padded-batch path (2 chunks, 1024-row pad).
    B2 = 600
    x2 = jax.random.normal(xkey2, (B2, IN_FEATS), dtype=jnp.float32)
    out2 = jax.block_until_ready(fwd(x2, packed))
    ref2 = seedbase2_reference(x2, raw_params)
    assert out2.shape == (B2, H2) and out2.dtype == jnp.float32
    assert bool(jnp.all(jnp.isfinite(out2)))
    assert float(jnp.max(jnp.abs(out2 - ref2))) < 0.2

    print("KERNEL_OK")
</pallas_src>

<mosaic_0001>
module attributes {stable_mosaic.version = 11 : i64} {
  func.func @kernel(%arg0: i32, %arg1: i32, %arg2: memref<8x310xf32, #tpu.memory_space<vmem>>, %arg3: memref<310x128xbf16, #tpu.memory_space<vmem>>, %arg4: memref<128x128xbf16, #tpu.memory_space<vmem>>, %arg5: memref<8x128xf32, #tpu.memory_space<vmem>>, %arg6: memref<8x128xf32, #tpu.memory_space<vmem>>, %arg7: memref<8x128xbf16, #tpu.memory_space<vmem>>, %arg8: memref<8x128xf32, #tpu.memory_space<vmem>>) attributes {dimension_semantics = [#tpu.dimension_semantics<arbitrary>, #tpu.dimension_semantics<arbitrary>], iteration_bounds = array<i64: 3, 1>, scalar_prefetch = 0 : i64, scratch_operands = 2 : i64, tpu.core_type = #tpu.core_type<tc>, window_params = [{transform_indices = @transform_0, window_bounds = array<i64: 8, 310>}, {pipeline_mode = #tpu.pipeline_mode<synchronous>, transform_indices = @transform_1, window_bounds = array<i64: 310, 128>}, {pipeline_mode = #tpu.pipeline_mode<synchronous>, transform_indices = @transform_2, window_bounds = array<i64: 128, 128>}, {pipeline_mode = #tpu.pipeline_mode<synchronous>, transform_indices = @transform_3, window_bounds = array<i64: 8, 128>}, {transform_indices = @transform_4, window_bounds = array<i64: 8, 128>}]} {
    %c8_i32 = arith.constant 8 : i32
    %0 = arith.muli %arg1, %c8_i32 : i32
    %1 = tpu.assume_multiple %0, 8 : i32
    %c0_i32 = arith.constant 0 : i32
    %2 = arith.cmpi eq, %arg0, %c0_i32 : i32
    %3 = arith.extui %2 : i1 to i32
    %c0_i32_0 = arith.constant 0 : i32
    %4 = arith.cmpi ne, %3, %c0_i32_0 : i32
    scf.if %4 {
      %c0_i32_3 = arith.constant 0 : i32
      %11 = arith.cmpi eq, %arg1, %c0_i32_3 : i32
      %12 = arith.extui %11 : i1 to i32
      %c0_i32_4 = arith.constant 0 : i32
      %13 = arith.cmpi ne, %12, %c0_i32_4 : i32
      scf.if %13 {
        %cst_18 = arith.constant 0.000000e+00 : f32
        %33 = vector.broadcast %cst_18 : f32 to vector<8x128xf32>
        %c0_19 = arith.constant 0 : index
        %c0_20 = arith.constant 0 : index
        %34 = vector.load %arg8[%c0_19, %c0_20] : memref<8x128xf32, #tpu.memory_space<vmem>>, vector<8x128xf32>
        tpu.vector_store %arg8[%c0_19, %c0_20], %33 {strides = array<i32>} : memref<8x128xf32, #tpu.memory_space<vmem>>, vector<8x128xf32>,
      } else {
      }
      %c0 = arith.constant 0 : index
      %c0_5 = arith.constant 0 : index
      %14 = vector.load %arg2[%c0, %c0_5] : memref<8x310xf32, #tpu.memory_space<vmem>>, vector<8x310xf32>
      %15 = arith.truncf %14 : vector<8x310xf32> to vector<8x310xbf16>
      %c0_6 = arith.constant 0 : index
      %c0_7 = arith.constant 0 : index
      %16 = vector.load %arg3[%c0_6, %c0_7] : memref<310x128xbf16, #tpu.memory_space<vmem>>, vector<310x128xbf16>
      %cst = arith.constant dense<0.000000e+00> : vector<8x128xf32>
      %17 = tpu.matmul %15, %16, %cst {dimension_numbers = #tpu.dot_dimension_numbers<[1], [0], [0], [1], [0, 0, 1, 1], [], []>} : vector<8x310xbf16>, vector<310x128xbf16>, vector<8x128xf32> -> vector<8x128xf32>
      %18 = arith.truncf %17 : vector<8x128xf32> to vector<8x128xbf16>
      %19 = arith.index_cast %1 : i32 to index
      %c0_8 = arith.constant 0 : index
      %20 = vector.load %arg7[%19, %c0_8] : memref<8x128xbf16, #tpu.memory_space<vmem>>, vector<8x128xbf16>
      tpu.vector_store %arg7[%19, %c0_8], %18 {strides = array<i32>} : memref<8x128xbf16, #tpu.memory_space<vmem>>, vector<8x128xbf16>,
      %21 = arith.extf %18 : vector<8x128xbf16> to vector<8x128xf32>
      %c0_9 = arith.constant 0 : index
      %c0_10 = arith.constant 0 : index
      %22 = vector.load %arg8[%c0_9, %c0_10] : memref<8x128xf32, #tpu.memory_space<vmem>>, vector<1x128xf32>
      %cst_11 = arith.constant dense<0.000000e+00> : vector<128xf32>
      %23 = vector.multi_reduction <add>, %21, %cst_11 [0] : vector<8x128xf32> to vector<128xf32>
      %24 = vector.shape_cast %23 : vector<128xf32> to vector<1x128xf32>
      %25 = arith.addf %22, %24 : vector<1x128xf32>
      %c0_12 = arith.constant 0 : index
      %c0_13 = arith.constant 0 : index
      %26 = vector.load %arg8[%c0_12, %c0_13] : memref<8x128xf32, #tpu.memory_space<vmem>>, vector<1x128xf32>
      tpu.vector_store %arg8[%c0_12, %c0_13], %25 {strides = array<i32>} : memref<8x128xf32, #tpu.memory_space<vmem>>, vector<1x128xf32>,
      %c1 = arith.constant 1 : index
      %c0_14 = arith.constant 0 : index
      %27 = vector.load %arg8[%c1, %c0_14] : memref<8x128xf32, #tpu.memory_space<vmem>>, vector<1x128xf32>
      %28 = arith.mulf %21, %21 : vector<8x128xf32>
      %cst_15 = arith.constant dense<0.000000e+00> : vector<128xf32>
      %29 = vector.multi_reduction <add>, %28, %cst_15 [0] : vector<8x128xf32> to vector<128xf32>
      %30 = vector.shape_cast %29 : vector<128xf32> to vector<1x128xf32>
      %31 = arith.addf %27, %30 : vector<1x128xf32>
      %c1_16 = arith.constant 1 : index
      %c0_17 = arith.constant 0 : index
      %32 = vector.load %arg8[%c1_16, %c0_17] : memref<8x128xf32, #tpu.memory_space<vmem>>, vector<1x128xf32>
      tpu.vector_store %arg8[%c1_16, %c0_17], %31 {strides = array<i32>} : memref<8x128xf32, #tpu.memory_space<vmem>>, vector<1x128xf32>,
    } else {
    }
    %c1_i32 = arith.constant 1 : i32
    %5 = arith.cmpi eq, %arg0, %c1_i32 : i32
    %6 = arith.extui %5 : i1 to i32
    %c0_i32_1 = arith.constant 0 : i32
    %7 = arith.cmpi ne, %6, %c0_i32_1 : i32
    scf.if %7 {
      %c0_i32_3 = arith.constant 0 : i32
      %11 = arith.cmpi eq, %arg1, %c0_i32_3 : i32
      %12 = arith.extui %11 : i1 to i32
      %c0_i32_4 = arith.constant 0 : i32
      %13 = arith.cmpi ne, %12, %c0_i32_4 : i32
      scf.if %13 {
        %c0_18 = arith.constant 0 : index
        %c0_19 = arith.constant 0 : index
        %39 = vector.load %arg8[%c0_18, %c0_19] : memref<8x128xf32, #tpu.memory_space<vmem>>, vector<1x128xf32>
        %cst_20 = arith.constant 1.250000e-01 : f32
        %40 = vector.broadcast %cst_20 : f32 to vector<1x128xf32>
        %41 = arith.mulf %39, %40 : vector<1x128xf32>
        %c1 = arith.constant 1 : index
        %c0_21 = arith.constant 0 : index
        %42 = vector.load %arg8[%c1, %c0_21] : memref<8x128xf32, #tpu.memory_space<vmem>>, vector<1x128xf32>
        %cst_22 = arith.constant 1.250000e-01 : f32
        %43 = vector.broadcast %cst_22 : f32 to vector<1x128xf32>
        %44 = arith.mulf %42, %43 : vector<1x128xf32>
        %45 = arith.mulf %41, %41 : vector<1x128xf32>
        %46 = arith.subf %44, %45 : vector<1x128xf32>
        %cst_23 = arith.constant 0.000000e+00 : f32
        %47 = vector.broadcast %cst_23 : f32 to vector<1x128xf32>
        %48 = arith.maximumf %46, %47 : vector<1x128xf32>
        %c0_24 = arith.constant 0 : index
        %c0_25 = arith.constant 0 : index
        %49 = vector.load %arg5[%c0_24, %c0_25] : memref<8x128xf32, #tpu.memory_space<vmem>>, vector<1x128xf32>
        %cst_26 = arith.constant 9.99999974E-6 : f32
        %50 = vector.broadcast %cst_26 : f32 to vector<1x128xf32>
        %51 = arith.addf %48, %50 : vector<1x128xf32>
        %52 = math.rsqrt %51 : vector<1x128xf32>
        %53 = arith.mulf %49, %52 : vector<1x128xf32>
        %c4_27 = arith.constant 4 : index
        %c0_28 = arith.constant 0 : index
        %54 = vector.load %arg8[%c4_27, %c0_28] : memref<8x128xf32, #tpu.memory_space<vmem>>, vector<1x128xf32>
        tpu.vector_store %arg8[%c4_27, %c0_28], %53 {strides = array<i32>} : memref<8x128xf32, #tpu.memory_space<vmem>>, vector<1x128xf32>,
        %c1_29 = arith.constant 1 : index
        %c0_30 = arith.constant 0 : index
        %55 = vector.load %arg5[%c1_29, %c0_30] : memref<8x128xf32, #tpu.memory_space<vmem>>, vector<1x128xf32>
        %56 = arith.mulf %41, %53 : vector<1x128xf32>
        %57 = arith.subf %55, %56 : vector<1x128xf32>
        %c5_31 = arith.constant 5 : index
        %c0_32 = arith.constant 0 : index
        %58 = vector.load %arg8[%c5_31, %c0_32] : memref<8x128xf32, #tpu.memory_space<vmem>>, vector<1x128xf32>
        tpu.vector_store %arg8[%c5_31, %c0_32], %57 {strides = array<i32>} : memref<8x128xf32, #tpu.memory_space<vmem>>, vector<1x128xf32>,
      } else {
      }
      %14 = arith.index_cast %1 : i32 to index
      %c0 = arith.constant 0 : index
      %15 = vector.load %arg7[%14, %c0] : memref<8x128xbf16, #tpu.memory_space<vmem>>, vector<8x128xbf16>
      %16 = arith.extf %15 : vector<8x128xbf16> to vector<8x128xf32>
      %c4 = arith.constant 4 : index
      %c0_5 = arith.constant 0 : index
      %17 = vector.load %arg8[%c4, %c0_5] : memref<8x128xf32, #tpu.memory_space<vmem>>, vector<1x128xf32>
      %18 = vector.broadcast %17 : vector<1x128xf32> to vector<8x128xf32>
      %19 = arith.mulf %16, %18 : vector<8x128xf32>
      %c5 = arith.constant 5 : index
      %c0_6 = arith.constant 0 : index
      %20 = vector.load %arg8[%c5, %c0_6] : memref<8x128xf32, #tpu.memory_space<vmem>>, vector<1x128xf32>
      %21 = vector.broadcast %20 : vector<1x128xf32> to vector<8x128xf32>
      %22 = arith.addf %19, %21 : vector<8x128xf32>
      %cst = arith.constant 0.000000e+00 : f32
      %23 = vector.broadcast %cst : f32 to vector<8x128xf32>
      %24 = arith.maximumf %22, %23 : vector<8x128xf32>
      %25 = arith.truncf %24 : vector<8x128xf32> to vector<8x128xbf16>
      %c0_7 = arith.constant 0 : index
      %c0_8 = arith.constant 0 : index
      %26 = vector.load %arg4[%c0_7, %c0_8] : memref<128x128xbf16, #tpu.memory_space<vmem>>, vector<128x128xbf16>
      %cst_9 = arith.constant dense<0.000000e+00> : vector<8x128xf32>
      %27 = tpu.matmul %25, %26, %cst_9 {dimension_numbers = #tpu.dot_dimension_numbers<[1], [0], [0], [1], [0, 0, 1, 1], [], []>} : vector<8x128xbf16>, vector<128x128xbf16>, vector<8x128xf32> -> vector<8x128xf32>
      %c2 = arith.constant 2 : index
      %c0_10 = arith.constant 0 : index
      %28 = vector.load %arg8[%c2, %c0_10] : memref<8x128xf32, #tpu.memory_space<vmem>>, vector<1x128xf32>
      %cst_11 = arith.constant dense<0.000000e+00> : vector<128xf32>
      %29 = vector.multi_reduction <add>, %27, %cst_11 [0] : vector<8x128xf32> to vector<128xf32>
      %30 = vector.shape_cast %29 : vector<128xf32> to vector<1x128xf32>
      %31 = arith.addf %28, %30 : vector<1x128xf32>
      %c2_12 = arith.constant 2 : index
      %c0_13 = arith.constant 0 : index
      %32 = vector.load %arg8[%c2_12, %c0_13] : memref<8x128xf32, #tpu.memory_space<vmem>>, vector<1x128xf32>
      tpu.vector_store %arg8[%c2_12, %c0_13], %31 {strides = array<i32>} : memref<8x128xf32, #tpu.memory_space<vmem>>, vector<1x128xf32>,
      %c3 = arith.constant 3 : index
      %c0_14 = arith.constant 0 : index
      %33 = vector.load %arg8[%c3, %c0_14] : memref<8x128xf32, #tpu.memory_space<vmem>>, vector<1x128xf32>
      %34 = arith.mulf %27, %27 : vector<8x128xf32>
      %cst_15 = arith.constant dense<0.000000e+00> : vector<128xf32>
      %35 = vector.multi_reduction <add>, %34, %cst_15 [0] : vector<8x128xf32> to vector<128xf32>
      %36 = vector.shape_cast %35 : vector<128xf32> to vector<1x128xf32>
      %37 = arith.addf %33, %36 : vector<1x128xf32>
      %c3_16 = arith.constant 3 : index
      %c0_17 = arith.constant 0 : index
      %38 = vector.load %arg8[%c3_16, %c0_17] : memref<8x128xf32, #tpu.memory_space<vmem>>, vector<1x128xf32>
      tpu.vector_store %arg8[%c3_16, %c0_17], %37 {strides = array<i32>} : memref<8x128xf32, #tpu.memory_space<vmem>>, vector<1x128xf32>,
    } else {
    }
    %c2_i32 = arith.constant 2 : i32
    %8 = arith.cmpi eq, %arg0, %c2_i32 : i32
    %9 = arith.extui %8 : i1 to i32
    %c0_i32_2 = arith.constant 0 : i32
    %10 = arith.cmpi ne, %9, %c0_i32_2 : i32
    scf.if %10 {
      %c0_i32_3 = arith.constant 0 : i32
      %11 = arith.cmpi eq, %arg1, %c0_i32_3 : i32
      %12 = arith.extui %11 : i1 to i32
      %c0_i32_4 = arith.constant 0 : i32
      %13 = arith.cmpi ne, %12, %c0_i32_4 : i32
      scf.if %13 {
        %c2 = arith.constant 2 : index
        %c0_15 = arith.constant 0 : index
        %37 = vector.load %arg8[%c2, %c0_15] : memref<8x128xf32, #tpu.memory_space<vmem>>, vector<1x128xf32>
        %cst_16 = arith.constant 1.250000e-01 : f32
        %38 = vector.broadcast %cst_16 : f32 to vector<1x128xf32>
        %39 = arith.mulf %37, %38 : vector<1x128xf32>
        %c3 = arith.constant 3 : index
        %c0_17 = arith.constant 0 : index
        %40 = vector.load %arg8[%c3, %c0_17] : memref<8x128xf32, #tpu.memory_space<vmem>>, vector<1x128xf32>
        %cst_18 = arith.constant 1.250000e-01 : f32
        %41 = vector.broadcast %cst_18 : f32 to vector<1x128xf32>
        %42 = arith.mulf %40, %41 : vector<1x128xf32>
        %43 = arith.mulf %39, %39 : vector<1x128xf32>
        %44 = arith.subf %42, %43 : vector<1x128xf32>
        %cst_19 = arith.constant 0.000000e+00 : f32
        %45 = vector.broadcast %cst_19 : f32 to vector<1x128xf32>
        %46 = arith.maximumf %44, %45 : vector<1x128xf32>
        %c2_20 = arith.constant 2 : index
        %c0_21 = arith.constant 0 : index
        %47 = vector.load %arg5[%c2_20, %c0_21] : memref<8x128xf32, #tpu.memory_space<vmem>>, vector<1x128xf32>
        %cst_22 = arith.constant 9.99999974E-6 : f32
        %48 = vector.broadcast %cst_22 : f32 to vector<1x128xf32>
        %49 = arith.addf %46, %48 : vector<1x128xf32>
        %50 = math.rsqrt %49 : vector<1x128xf32>
        %51 = arith.mulf %47, %50 : vector<1x128xf32>
        %c6_23 = arith.constant 6 : index
        %c0_24 = arith.constant 0 : index
        %52 = vector.load %arg8[%c6_23, %c0_24] : memref<8x128xf32, #tpu.memory_space<vmem>>, vector<1x128xf32>
        tpu.vector_store %arg8[%c6_23, %c0_24], %51 {strides = array<i32>} : memref<8x128xf32, #tpu.memory_space<vmem>>, vector<1x128xf32>,
        %c3_25 = arith.constant 3 : index
        %c0_26 = arith.constant 0 : index
        %53 = vector.load %arg5[%c3_25, %c0_26] : memref<8x128xf32, #tpu.memory_space<vmem>>, vector<1x128xf32>
        %54 = arith.mulf %39, %51 : vector<1x128xf32>
        %55 = arith.subf %53, %54 : vector<1x128xf32>
        %c7_27 = arith.constant 7 : index
        %c0_28 = arith.constant 0 : index
        %56 = vector.load %arg8[%c7_27, %c0_28] : memref<8x128xf32, #tpu.memory_space<vmem>>, vector<1x128xf32>
        tpu.vector_store %arg8[%c7_27, %c0_28], %55 {strides = array<i32>} : memref<8x128xf32, #tpu.memory_space<vmem>>, vector<1x128xf32>,
      } else {
      }
      %14 = arith.index_cast %1 : i32 to index
      %c0 = arith.constant 0 : index
      %15 = vector.load %arg7[%14, %c0] : memref<8x128xbf16, #tpu.memory_space<vmem>>, vector<8x128xbf16>
      %16 = arith.extf %15 : vector<8x128xbf16> to vector<8x128xf32>
      %c4 = arith.constant 4 : index
      %c0_5 = arith.constant 0 : index
      %17 = vector.load %arg8[%c4, %c0_5] : memref<8x128xf32, #tpu.memory_space<vmem>>, vector<1x128xf32>
      %18 = vector.broadcast %17 : vector<1x128xf32> to vector<8x128xf32>
      %19 = arith.mulf %16, %18 : vector<8x128xf32>
      %c5 = arith.constant 5 : index
      %c0_6 = arith.constant 0 : index
      %20 = vector.load %arg8[%c5, %c0_6] : memref<8x128xf32, #tpu.memory_space<vmem>>, vector<1x128xf32>
      %21 = vector.broadcast %20 : vector<1x128xf32> to vector<8x128xf32>
      %22 = arith.addf %19, %21 : vector<8x128xf32>
      %cst = arith.constant 0.000000e+00 : f32
      %23 = vector.broadcast %cst : f32 to vector<8x128xf32>
      %24 = arith.maximumf %22, %23 : vector<8x128xf32>
      %25 = arith.truncf %24 : vector<8x128xf32> to vector<8x128xbf16>
      %c0_7 = arith.constant 0 : index
      %c0_8 = arith.constant 0 : index
      %26 = vector.load %arg4[%c0_7, %c0_8] : memref<128x128xbf16, #tpu.memory_space<vmem>>, vector<128x128xbf16>
      %cst_9 = arith.constant dense<0.000000e+00> : vector<8x128xf32>
      %27 = tpu.matmul %25, %26, %cst_9 {dimension_numbers = #tpu.dot_dimension_numbers<[1], [0], [0], [1], [0, 0, 1, 1], [], []>} : vector<8x128xbf16>, vector<128x128xbf16>, vector<8x128xf32> -> vector<8x128xf32>
      %c6 = arith.constant 6 : index
      %c0_10 = arith.constant 0 : index
      %28 = vector.load %arg8[%c6, %c0_10] : memref<8x128xf32, #tpu.memory_space<vmem>>, vector<1x128xf32>
      %29 = vector.broadcast %28 : vector<1x128xf32> to vector<8x128xf32>
      %30 = arith.mulf %27, %29 : vector<8x128xf32>
      %c7 = arith.constant 7 : index
      %c0_11 = arith.constant 0 : index
      %31 = vector.load %arg8[%c7, %c0_11] : memref<8x128xf32, #tpu.memory_space<vmem>>, vector<1x128xf32>
      %32 = vector.broadcast %31 : vector<1x128xf32> to vector<8x128xf32>
      %33 = arith.addf %30, %32 : vector<8x128xf32>
      %cst_12 = arith.constant 0.000000e+00 : f32
      %34 = vector.broadcast %cst_12 : f32 to vector<8x128xf32>
      %35 = arith.maximumf %33, %34 : vector<8x128xf32>
      %c0_13 = arith.constant 0 : index
      %c0_14 = arith.constant 0 : index
      %36 = vector.load %arg6[%c0_13, %c0_14] : memref<8x128xf32, #tpu.memory_space<vmem>>, vector<8x128xf32>
      tpu.vector_store %arg6[%c0_13, %c0_14], %35 {strides = array<i32>} : memref<8x128xf32, #tpu.memory_space<vmem>>, vector<8x128xf32>,
    } else {
    }
    return
  }
  func.func @transform_0(%arg0: i32, %arg1: i32) -> (i32, i32) {
    %c0_i32 = arith.constant 0 : i32
    %0 = arith.cmpi eq, %arg0, %c0_i32 : i32
    %c0_i32_0 = arith.constant 0 : i32
    %1 = arith.select %0, %arg1, %c0_i32_0 : i32
    %c0_i32_1 = arith.constant 0 : i32
    %c0_i32_2 = arith.constant 0 : i32
    return %1, %c0_i32_1 : i32, i32
  }
  func.func @transform_1(%arg0: i32, %arg1: i32) -> (i32, i32) {
    %c0_i32 = arith.constant 0 : i32
    %c0_i32_0 = arith.constant 0 : i32
    %c0_i32_1 = arith.constant 0 : i32
    return %c0_i32, %c0_i32_0 : i32, i32
  }
  func.func @transform_2(%arg0: i32, %arg1: i32) -> (i32, i32) {
    %c0_i32 = arith.constant 0 : i32
    %c0_i32_0 = arith.constant 0 : i32
    %c0_i32_1 = arith.constant 0 : i32
    return %c0_i32, %c0_i32_0 : i32, i32
  }
  func.func @transform_3(%arg0: i32, %arg1: i32) -> (i32, i32) {
    %c0_i32 = arith.constant 0 : i32
    %c0_i32_0 = arith.constant 0 : i32
    %c0_i32_1 = arith.constant 0 : i32
    return %c0_i32, %c0_i32_0 : i32, i32
  }
  func.func @transform_4(%arg0: i32, %arg1: i32) -> (i32, i32) {
    %c2_i32 = arith.constant 2 : i32
    %0 = arith.cmpi eq, %arg0, %c2_i32 : i32
    %c0_i32 = arith.constant 0 : i32
    %1 = arith.select %0, %arg1, %c0_i32 : i32
    %c0_i32_0 = arith.constant 0 : i32
    %c0_i32_1 = arith.constant 0 : i32
    return %1, %c0_i32_0 : i32, i32
  }
}

</mosaic_0001>

<llo_original>
// kernel: seedbase2_forward.1
$region0: #{seedbase2_forward.1}
  #allocation0 [shape = 'u32[]', space=smem, size = 0x4, offset = 0x4, fixed_abs, tag = 'smem constant byte address 0x4 - core index']
  #allocation1 [shape = 'u32[144,128]{1,0:T(1,128)}', space=vmem, size = 0x12000, scoped, tag = 'internal scratch']
  #allocation2 [shape = 'bf16[8,128]{1,0:T(8,128)(2,1)}', space=vmem, size = 0x800, scoped, tag = 'scratch operand']
  #allocation3 [shape = 'f32[8,128]{1,0:T(8,128)}', space=vmem, size = 0x1000, scoped, tag = 'scratch operand']
  %s0 = inlined_call_operand.vmem [shape: f32[8,310], index: 0, kind: input, shape index: {}]
  %s1 = inlined_call_operand.vmem [shape: bf16[310,128], index: 1, kind: input, shape index: {}]
  %s2 = inlined_call_operand.vmem [shape: bf16[128,128], index: 2, kind: input, shape index: {}]
  %s3 = inlined_call_operand.vmem [shape: f32[8,128], index: 3, kind: input, shape index: {}]
  %s4 = inlined_call_operand.hbm [shape: f32[8,128], index: 4, kind: output, shape index: {}]
  %s5 = sld [smem:[#allocation0]]
  $region73: #{seedbase2_forward.1} parent=0
    _
  %s7 = ssub.s32 1, %s5
  %s8 = scalar_select 0, %s7, %s5
  $region1: #{seedbase2_forward.1} parent=0
    #allocation4 [shape = 'u8[8192]{0}', space=vmem, size = 0x2000, scoped, tag = 'output window, operand 0']
    #allocation5 [shape = 's32[2]{0}', space=sflag, size = 0x8, scoped, tag = 'scoped memory for seedbase2_forward.1']
    %9 = vsyncpa [#allocation5], 0
    %s10 = scalar_lea.sflag [#allocation5], 1
    %11 = vsyncpa %s10, 0
    loop: start=0, step=1, limit=5
    $region2: #{seedbase2_forward.1} parent=1 // loop_pre_header
      _
    $region3: #{seedbase2_forward.1} parent=1 // loop_header
      %s13 = sphi 0, %s17
      %p14 = scmp.ge.s32.totalorder %s13, 5
      %s20 = sphi 0, %s32
      %s21 = sphi 0, %s28
      %s22 = sphi 0, %s20
      %s23 = sphi 0, %s21
      %s24 = sphi 0, %s22
      %s25 = sphi 0, %s23
      %s39 = sphi 0, %s41
      %s42 = sphi 0, %s39
      %s43 = sphi 0, %s42
      %s59 = sphi 0, %s43
      %s63 = sphi 0, %s63
      %s65 = sphi 0, %s63
      %s66 = sphi 0, %s65
      %s80 = sphi 0, %s66
      %s84 = sphi 0, %s84
      %s86 = sphi 0, %s84
      %s87 = sphi 0, %s86
      %s101 = sphi 0, %s87
      %s105 = sphi 0, %s105
      %s107 = sphi 0, %s105
      %s108 = sphi 0, %s107
      %s122 = sphi 0, %s108
      %s132 = sphi 0, %s134
      %s135 = sphi 0, %s132
      %s136 = sphi 0, %s135
      %s152 = sphi 0, %s136
    $region4: #{seedbase2_forward.1} parent=1 // loop_header_branch
      %16 = sbr.rel (%p14) target = $region8
    $region5: #{seedbase2_forward.1} parent=1 // loop_body
      %s18 = ssub.s32 %s13, 1
      %s19 = ssub.s32 %s13, 2
      %s26 = sadd.s32 1, %s21
      %p27 = scmp.ge.s32.totalorder %s26, 1
      %s28 = scalar_select %p27, 0, %s26
      %s29 = sadd.s32 1, %s20
      %s30 = scalar_select %p27, %s29, %s20
      %p31 = scmp.ge.s32.totalorder %s30, 3
      %s32 = scalar_select %p31, 0, %s30
      %p33 = scmp.eq.s32.totalorder %s20, 0
      %s34 = scalar_select %p33, %s21, 0
      %p35 = scmp.eq.s32.totalorder %s32, 0
      %s36 = scalar_select %p35, %s28, 0
      %s37 = ssub.s32 %s34, %s36
      %p38 = scmp.eq.s32.totalorder %s37, 0
      %s40 = sadd.s32 %s39, 1
      %s41 = scalar_select %p38, %s39, %s40
      %p44 = pneg %p38
      %p45 = scmp.eq.s32.totalorder %s13, 2
      %p46 = por %p44, %p45
      %p47 = scmp.ne.s32.totalorder %s39, %s42
      %p48 = scmp.eq.s32.totalorder %s13, 0
      %p49 = por %p47, %p48
      %p50 = scmp.ne.s32.totalorder %s39, %s42
      %p51 = scmp.eq.s32.totalorder %s18, 2
      %p52 = por %p50, %p51
      %p53 = scmp.ne.s32.totalorder %s42, %s43
      %p54 = scmp.eq.s32.totalorder %s18, 0
      %p55 = por %p53, %p54
      %p56 = scmp.ne.s32.totalorder %s42, %s43
      %p57 = scmp.eq.s32.totalorder %s19, 2
      %p58 = por %p56, %p57
      %p60 = scmp.ne.s32.totalorder %s43, %s59
      %p61 = scmp.eq.s32.totalorder %s19, 0
      %p62 = por %p60, %p61
      %s64 = sadd.s32 %s63, 1
      %p67 = scmp.eq.s32.totalorder %s13, 2
      %p68 = scmp.ne.s32.totalorder %s63, %s65
      %p69 = scmp.eq.s32.totalorder %s13, 0
      %p70 = por %p68, %p69
      %p71 = scmp.ne.s32.totalorder %s63, %s65
      %p72 = scmp.eq.s32.totalorder %s18, 2
      %p73 = por %p71, %p72
      %p74 = scmp.ne.s32.totalorder %s65, %s66
      %p75 = scmp.eq.s32.totalorder %s18, 0
      %p76 = por %p74, %p75
      %p77 = scmp.ne.s32.totalorder %s65, %s66
      %p78 = scmp.eq.s32.totalorder %s19, 2
      %p79 = por %p77, %p78
      %p81 = scmp.ne.s32.totalorder %s66, %s80
      %p82 = scmp.eq.s32.totalorder %s19, 0
      %p83 = por %p81, %p82
      %s85 = sadd.s32 %s84, 1
      %p88 = scmp.eq.s32.totalorder %s13, 2
      %p89 = scmp.ne.s32.totalorder %s84, %s86
      %p90 = scmp.eq.s32.totalorder %s13, 0
      %p91 = por %p89, %p90
      %p92 = scmp.ne.s32.totalorder %s84, %s86
      %p93 = scmp.eq.s32.totalorder %s18, 2
      %p94 = por %p92, %p93
      %p95 = scmp.ne.s32.totalorder %s86, %s87
      %p96 = scmp.eq.s32.totalorder %s18, 0
      %p97 = por %p95, %p96
      %p98 = scmp.ne.s32.totalorder %s86, %s87
      %p99 = scmp.eq.s32.totalorder %s19, 2
      %p100 = por %p98, %p99
      %p102 = scmp.ne.s32.totalorder %s87, %s101
      %p103 = scmp.eq.s32.totalorder %s19, 0
      %p104 = por %p102, %p103
      %s106 = sadd.s32 %s105, 1
      %p109 = scmp.eq.s32.totalorder %s13, 2
      %p110 = scmp.ne.s32.totalorder %s105, %s107
      %p111 = scmp.eq.s32.totalorder %s13, 0
      %p112 = por %p110, %p111
      %p113 = scmp.ne.s32.totalorder %s105, %s107
      %p114 = scmp.eq.s32.totalorder %s18, 2
      %p115 = por %p113, %p114
      %p116 = scmp.ne.s32.totalorder %s107, %s108
      %p117 = scmp.eq.s32.totalorder %s18, 0
      %p118 = por %p116, %p117
      %p119 = scmp.ne.s32.totalorder %s107, %s108
      %p120 = scmp.eq.s32.totalorder %s19, 2
      %p121 = por %p119, %p120
      %p123 = scmp.ne.s32.totalorder %s108, %s122
      %p124 = scmp.eq.s32.totalorder %s19, 0
      %p125 = por %p123, %p124
      %p126 = scmp.eq.s32.totalorder %s20, 2
      %s127 = scalar_select %p126, %s21, 0
      %p128 = scmp.eq.s32.totalorder %s32, 2
      %s129 = scalar_select %p128, %s28, 0
      %s130 = ssub.s32 %s127, %s129
      %p131 = scmp.eq.s32.totalorder %s130, 0
      %s133 = sadd.s32 %s132, 1
      %s134 = scalar_select %p131, %s132, %s133
      %p137 = pneg %p131
      %p138 = scmp.eq.s32.totalorder %s13, 2
      %p139 = por %p137, %p138
      %p140 = scmp.ne.s32.totalorder %s132, %s135
      %p141 = scmp.eq.s32.totalorder %s13, 0
      %p142 = por %p140, %p141
      %p143 = scmp.ne.s32.totalorder %s132, %s135
      %p144 = scmp.eq.s32.totalorder %s18, 2
      %p145 = por %p143, %p144
      %p146 = scmp.ne.s32.totalorder %s135, %s136
      %p147 = scmp.eq.s32.totalorder %s18, 0
      %p148 = por %p146, %p147
      %p149 = scmp.ne.s32.totalorder %s135, %s136
      %p150 = scmp.eq.s32.totalorder %s19, 2
      %p151 = por %p149, %p150
      %p153 = scmp.ne.s32.totalorder %s136, %s152
      %p154 = scmp.eq.s32.totalorder %s19, 0
      %p155 = por %p153, %p154
      %p156 = scmp.le.s32.totalorder 1, %s13
      %p157 = scmp.lt.s32.totalorder %s13, 4
      %p158 = pnand %p156, %p157
      %p159 = pneg %p158
      // Predicated region
      $region9: #{seedbase2_forward.1} parent=5 // pred_check
        _
      $region10: #{seedbase2_forward.1} parent=5 // pred_check_branch
        %161 = sbr.rel (%p158) target = $region12
      $region11: #{seedbase2_forward.1} parent=5 // pred_region
        %s162 = ssub.s32 %s13, 1
        // Predicated region
        $region13: #{seedbase2_forward.1} parent=11 // pred_check
          %p163 = pneg %p76
        $region14: #{seedbase2_forward.1} parent=11 // pred_check_branch
          %165 = sbr.rel (%p163) target = $region16
        $region15: #{seedbase2_forward.1} parent=11 // pred_region
          _
        $region16: #{seedbase2_forward.1} parent=11 // pred_fallthru
          _
        // Predicated region
        $region17: #{seedbase2_forward.1} parent=11 // pred_check
          %p166 = pneg %p97
        $region18: #{seedbase2_forward.1} parent=11 // pred_check_branch
          %168 = sbr.rel (%p166) target = $region20
        $region19: #{seedbase2_forward.1} parent=11 // pred_region
          _
        $region20: #{seedbase2_forward.1} parent=11 // pred_fallthru
          _
        // Predicated region
        $region21: #{seedbase2_forward.1} parent=11 // pred_check
          %p169 = pneg %p118
        $region22: #{seedbase2_forward.1} parent=11 // pred_check_branch
          %171 = sbr.rel (%p169) target = $region24
        $region23: #{seedbase2_forward.1} parent=11 // pred_region
          _
        $region24: #{seedbase2_forward.1} parent=11 // pred_fallthru
          _
      $region12: #{seedbase2_forward.1} parent=5 // pred_fallthru
        _
      %p172 = scmp.lt.s32.totalorder %s13, 3
      // Predicated region
      $region25: #{seedbase2_forward.1} parent=5 // pred_check
        %p173 = pneg %p172
      $region26: #{seedbase2_forward.1} parent=5 // pred_check_branch
        %175 = sbr.rel (%p173) target = $region28
      $region27: #{seedbase2_forward.1} parent=5 // pred_region
        // Predicated region
        $region29: #{seedbase2_forward.1} parent=27 // pred_check
          %p176 = pneg %p49
        $region30: #{seedbase2_forward.1} parent=27 // pred_check_branch
          %178 = sbr.rel (%p176) target = $region32
        $region31: #{seedbase2_forward.1} parent=27 // pred_region
          %p179 = scmp.eq.s32.totalorder %s20, 0
          %s180 = scalar_select %p179, %s21, 0
          %p181 = scmp.lt.s32.totalorder %s180, 0
          %s182 = scalar_select %p181, %s180, 0
          %s183 = smul.addr %s182, 3
          %s184 = smul.addr %s183, 8
          %s185 = scalar_lea.vmem %s0, %s184
          %p186 = scmp.eq.s32.totalorder %s20, 0
          %s187 = scalar_select %p186, %s21, 0
        $region32: #{seedbase2_forward.1} parent=27 // pred_fallthru
          _
      $region28: #{seedbase2_forward.1} parent=5 // pred_fallthru
        _
      %p188 = scmp.le.s32.totalorder 1, %s13
      %p189 = scmp.lt.s32.totalorder %s13, 4
      %p190 = pnand %p188, %p189
      %p191 = pneg %p190
      // Predicated region
      $region33: #{seedbase2_forward.1} parent=5 // pred_check
        _
      $region34: #{seedbase2_forward.1} parent=5 // pred_check_branch
        %193 = sbr.rel (%p190) target = $region36
      $region35: #{seedbase2_forward.1} parent=5 // pred_region
        %s194 = ssub.s32 %s13, 1
        %p195 = scmp.eq.s32.totalorder %s22, 0
        %s196 = scalar_select %p195, %s23, 0
        %p197 = scmp.lt.s32.totalorder %s196, 0
        %s198 = scalar_select %p197, %s196, 0
        %s199 = smul.addr %s198, 3
        %s200 = smul.addr %s199, 8
        %s201 = scalar_lea.vmem %s0, %s200
        %p202 = pneg %p55
        %p203 = pneg %p52
        %p204 = pneg %p76
        %p205 = pneg %p73
        %p206 = pneg %p97
        %p207 = pneg %p94
        %p208 = pneg %p118
        %p209 = pneg %p115
        %p210 = pneg %p148
        %p211 = pneg %p145
        %s212 = sand.u32 %s135, 1
        %s213 = scalar_lea.sflag [#allocation5], %s212
        %s214 = sand.u32 %s135, 1
        %s215 = smul.addr %s214, 8
        %s216 = scalar_lea.vmem [#allocation4], %s215
        %p217 = scmp.eq.s32.totalorder %s22, 0
        %s218 = scalar_select %p217, %s23, 0
        %p219 = scmp.lt.s32.totalorder %s218, 0
        %s220 = scalar_select %p219, %s218, 0
        %s221 = smul.addr %s220, 3
        %s222 = smul.addr %s221, 8
        %s223 = scalar_lea.vmem %s0, %s222
        %p224 = scmp.eq.s32.totalorder %s22, 0
        %s225 = scalar_select %p224, %s23, 0
        %p226 = scmp.eq.s32.totalorder %s22, 2
        %s227 = scalar_select %p226, %s23, 0
        %s229 = smul.u32 %s23, 8
        %p230 = scmp.eq.s32.totalorder %s22, 0
        // Predicated region
        $region37: #{seedbase2_forward.1} parent=35 // pred_check
          %p231 = pneg %p230
        $region38: #{seedbase2_forward.1} parent=35 // pred_check_branch
          %233 = sbr.rel (%p231) target = $region40
        $region39: #{seedbase2_forward.1} parent=35 // pred_region
          %p234 = scmp.eq.s32.totalorder %s23, 0
          // Predicated region
          $region41: #{seedbase2_forward.1} parent=39 // pred_check
            %p235 = pneg %p234
          $region42: #{seedbase2_forward.1} parent=39 // pred_check_branch
            %237 = sbr.rel (%p235) target = $region44
          $region43: #{seedbase2_forward.1} parent=39 // pred_region
            %238 = vst [vmem:[#allocation3] sm:$0xff] 0.0
          $region44: #{seedbase2_forward.1} parent=39 // pred_fallthru
            _
          %v239 = vld [vmem:[%s223] sm:$0xff]
          %v240 = vld [vmem:[%s223 + $0x8] sm:$0xff]
          %v241 = vld [vmem:[%s223 + $0x10] sm:$0xff]
          %v242 = vpack.c.bf16 %v239, %v239
          %v243 = vpack.c.bf16 %v240, %v240
          %v244 = vpack.c.bf16 %v241, %v241
          %v245 = vld [vmem:[%s1] sm:$0xf]
          %v246 = vld [vmem:[%s1 + $0x4] sm:$0xf]
          %v247 = vld [vmem:[%s1 + $0x8] sm:$0xf]
          %v248 = vld [vmem:[%s1 + $0xc] sm:$0xf]
          %v249 = vld [vmem:[%s1 + $0x10] sm:$0xf]
          %v250 = vld [vmem:[%s1 + $0x14] sm:$0xf]
          %v251 = vld [vmem:[%s1 + $0x18] sm:$0xf]
          %v252 = vld [vmem:[%s1 + $0x1c] sm:$0xf]
          %v253 = vld [vmem:[%s1 + $0x20] sm:$0xf]
          %v254 = vld [vmem:[%s1 + $0x24] sm:$0xf]
          %v255 = vld [vmem:[%s1 + $0x28] sm:$0xf]
          %v256 = vld [vmem:[%s1 + $0x2c] sm:$0xf]
          %v257 = vld [vmem:[%s1 + $0x30] sm:$0xf]
          %v258 = vld [vmem:[%s1 + $0x34] sm:$0xf]
          %v259 = vld [vmem:[%s1 + $0x38] sm:$0xf]
          %v260 = vld [vmem:[%s1 + $0x3c] sm:$0xf]
          %v261 = vld [vmem:[%s1 + $0x40] sm:$0xf]
          %v262 = vld [vmem:[%s1 + $0x44] sm:$0xf]
          %v263 = vld [vmem:[%s1 + $0x48] sm:$0xf]
          %v264 = vld [vmem:[%s1 + $0x4c] sm:$0xf]
          %v265 = vld [vmem:[%s1 + $0x50] sm:$0xf]
          %v266 = vld [vmem:[%s1 + $0x54] sm:$0xf]
          %v267 = vld [vmem:[%s1 + $0x58] sm:$0xf]
          %v268 = vld [vmem:[%s1 + $0x5c] sm:$0xf]
          %v269 = vld [vmem:[%s1 + $0x60] sm:$0xf]
          %v270 = vld [vmem:[%s1 + $0x64] sm:$0xf]
          %v271 = vld [vmem:[%s1 + $0x68] sm:$0xf]
          %v272 = vld [vmem:[%s1 + $0x6c] sm:$0xf]
          %v273 = vld [vmem:[%s1 + $0x70] sm:$0xf]
          %v274 = vld [vmem:[%s1 + $0x74] sm:$0xf]
          %v275 = vld [vmem:[%s1 + $0x78] sm:$0xf]
          %v276 = vld [vmem:[%s1 + $0x7c] sm:$0xf]
          %v277 = vld [vmem:[%s1 + $0x80] sm:$0xf]
          %v278 = vld [vmem:[%s1 + $0x84] sm:$0xf]
          %v279 = vld [vmem:[%s1 + $0x88] sm:$0xf]
          %v280 = vld [vmem:[%s1 + $0x8c] sm:$0xf]
          %v281 = vld [vmem:[%s1 + $0x90] sm:$0xf]
          %v282 = vld [vmem:[%s1 + $0x94] sm:$0xf]
          %v283 = vld [vmem:[%s1 + $0x98] sm:$0x7]
          %v323 = vunpack.c.l.b16 %v245
          %v324 = vunpack.c.l.b16 %v246
          %v325 = vunpack.c.l.b16 %v247
          %v326 = vunpack.c.l.b16 %v248
          %v327 = vunpack.c.l.b16 %v249
          %v328 = vunpack.c.l.b16 %v250
          %v329 = vunpack.c.l.b16 %v251
          %v330 = vunpack.c.l.b16 %v252
          %v331 = vunpack.c.l.b16 %v253
          %v332 = vunpack.c.l.b16 %v254
          %v333 = vunpack.c.l.b16 %v255
          %v334 = vunpack.c.l.b16 %v256
          %v335 = vunpack.c.l.b16 %v257
          %v336 = vunpack.c.l.b16 %v258
          %v337 = vunpack.c.l.b16 %v259
          %v338 = vunpack.c.l.b16 %v260
          %v339 = vunpack.c.l.b16 %v261
          %v340 = vunpack.c.l.b16 %v262
          %v341 = vunpack.c.l.b16 %v263
          %v342 = vunpack.c.l.b16 %v264
          %v343 = vunpack.c.l.b16 %v265
          %v344 = vunpack.c.l.b16 %v266
          %v345 = vunpack.c.l.b16 %v267
          %v346 = vunpack.c.l.b16 %v268
          %v347 = vunpack.c.l.b16 %v269
          %v348 = vunpack.c.l.b16 %v270
          %v349 = vunpack.c.l.b16 %v271
          %v350 = vunpack.c.l.b16 %v272
          %v351 = vunpack.c.l.b16 %v273
          %v352 = vunpack.c.l.b16 %v274
          %v353 = vunpack.c.l.b16 %v275
          %v354 = vunpack.c.l.b16 %v276
          %v355 = vunpack.c.l.b16 %v277
          %v356 = vunpack.c.l.b16 %v278
          %v357 = vunpack.c.l.b16 %v279
          %v358 = vunpack.c.l.b16 %v280
          %v359 = vunpack.c.l.b16 %v281
          %v360 = vunpack.c.l.b16 %v282
          %v361 = vunpack.c.l.b16 %v283
          %v362 = vpack.c.b16 %v324, %v323
          %v363 = vpack.c.b16 %v326, %v325
          %v364 = vpack.c.b16 %v328, %v327
          %v365 = vpack.c.b16 %v330, %v329
          %v366 = vpack.c.b16 %v332, %v331
          %v367 = vpack.c.b16 %v334, %v333
          %v368 = vpack.c.b16 %v336, %v335
          %v369 = vpack.c.b16 %v338, %v337
          %v370 = vpack.c.b16 %v340, %v339
          %v371 = vpack.c.b16 %v342, %v341
          %v372 = vpack.c.b16 %v344, %v343
          %v373 = vpack.c.b16 %v346, %v345
          %v374 = vpack.c.b16 %v348, %v347
          %v375 = vpack.c.b16 %v350, %v349
          %v376 = vpack.c.b16 %v352, %v351
          %v377 = vpack.c.b16 %v354, %v353
          %v378 = vpack.c.b16 %v356, %v355
          %v379 = vpack.c.b16 %v358, %v357
          %v380 = vpack.c.b16 %v360, %v359
          %v381 = vpack.c.b16 %v361, %v361
          %vm401 = vcmask 441344
          %v403 = vsel %vm401, %v244, 0
          %vm405 = vcmask 1042432
          %v407 = vsel %vm405, %v381, 0
          %409 = vmatprep.subr.bf16.mxu0 0
          %410 = vmatpush1.bf16.msra.mxu0 %v362
          %411 = vmatprep.subr.bf16.mxu0 0
          %412 = vmatpush1.bf16.msra.mxu0 %v363
          %413 = vmatprep.subr.bf16.mxu0 0
          %414 = vmatpush1.bf16.msra.mxu0 %v364
          %415 = vmatprep.subr.bf16.mxu0 0
          %416 = vmatpush1.bf16.msra.mxu0 %v365
          %417 = vmatprep.subr.bf16.mxu0 0
          %418 = vmatpush1.bf16.msra.mxu0 %v366
          %419 = vmatprep.subr.bf16.mxu0 0
          %420 = vmatpush1.bf16.msra.mxu0 %v367
          %421 = vmatprep.subr.bf16.mxu0 0
          %422 = vmatpush1.bf16.msra.mxu0 %v368
          %423 = vmatprep.subr.bf16.mxu0 0
          %424 = vmatpush1.bf16.msra.mxu0 %v369
          %425 = vmatprep.subr.bf16.mxu0 0
          %426 = vmatpush1.bf16.msra.mxu0 %v370
          %427 = vmatprep.subr.bf16.mxu0 0
          %428 = vmatpush1.bf16.msra.mxu0 %v371
          %429 = vmatprep.subr.bf16.mxu0 0
          %430 = vmatpush1.bf16.msra.mxu0 %v372
          %431 = vmatprep.subr.bf16.mxu0 0
          %432 = vmatpush1.bf16.msra.mxu0 %v373
          %433 = vmatprep.subr.bf16.mxu0 0
          %434 = vmatpush1.bf16.msra.mxu0 %v374
          %435 = vmatprep.subr.bf16.mxu0 0
          %436 = vmatpush1.bf16.msra.mxu0 %v375
          %437 = vmatprep.subr.bf16.mxu0 0
          %438 = vmatpush1.bf16.msra.mxu0 %v376
          %439 = vmatprep.subr.bf16.mxu0 0
          %440 = vmatpush1.bf16.msra.mxu0 %v377
          %441 = vmatprep.mubr.bf16.mxu0 %v243
          %442 = vmatmul.mubr.bf16.gmra.mrb[0].mxu0 %v242
          %v443 = vpop.f32.mrb[0].mxu0
          %v444 = vadd.f32 0.0, %v443
          %v445 = vpop.f32.mrb[0].mxu0
          %v446 = vpop.f32.mrb[0].mxu0
          %v447 = vpop.f32.mrb[0].mxu0
          %448 = vdwg.mxu0
          %449 = vmatprep.subr.bf16.mxu0 0
          %450 = vmatpush1.bf16.msra.mxu0 %v378
          %451 = vmatprep.subr.bf16.mxu0 0
          %452 = vmatpush1.bf16.msra.mxu0 %v379
          %453 = vmatprep.subr.bf16.mxu0 0
          %454 = vmatpush1.bf16.msra.mxu0 %v380
          %455 = vmatprep.subr.bf16.mxu0 0
          %456 = vmatpush1.bf16.msra.mxu0 %v407
          %457 = vmatprep.subr.bf16.mxu0 0
          %458 = vmatpush1.bf16.msra.mxu0 0
          %459 = vmatprep.subr.bf16.mxu0 0
          %460 = vmatpush1.bf16.msra.mxu0 0
          %461 = vmatprep.subr.bf16.mxu0 0
          %462 = vmatpush1.bf16.msra.mxu0 0
          %463 = vmatprep.subr.bf16.mxu0 0
          %464 = vmatpush1.bf16.msra.mxu0 0
          %465 = vmatprep.subr.bf16.mxu0 0
          %466 = vmatpush1.bf16.msra.mxu0 0
          %467 = vmatprep.subr.bf16.mxu0 0
          %468 = vmatpush1.bf16.msra.mxu0 0
          %469 = vmatprep.subr.bf16.mxu0 0
          %470 = vmatpush1.bf16.msra.mxu0 0
          %471 = vmatprep.subr.bf16.mxu0 0
          %472 = vmatpush1.bf16.msra.mxu0 0
          %473 = vmatprep.subr.bf16.mxu0 0
          %474 = vmatpush1.bf16.msra.mxu0 0
          %475 = vmatprep.subr.bf16.mxu0 0
          %476 = vmatpush1.bf16.msra.mxu0 0
          %477 = vmatprep.subr.bf16.mxu0 0
          %478 = vmatpush1.bf16.msra.mxu0 0
          %479 = vmatprep.subr.bf16.mxu0 0
          %480 = vmatpush1.bf16.msra.mxu0 0
          %481 = vmatprep.mubr.bf16.mxu0 0
          %482 = vmatmul.mubr.bf16.gmra.mrb[0].mxu0 %v403
          %v483 = vpop.f32.mrb[0].mxu0
          %v484 = vadd.f32 %v444, %v483
          %v485 = vpop.f32.mrb[0].mxu0
          %v486 = vpop.f32.mrb[0].mxu0
          %v487 = vpop.f32.mrb[0].mxu0
          %488 = vdwg.mxu0
          %v489 = vpack.c.bf16 %v484, %v484
          %s490 = sshra.s32 %s229, 3
          %s491 = sand.u32 %s229, 7
          %s492 = smul.addr %s490, 4
          %s493 = scalar_lea.vmem [#allocation2], %s492
          %494 = vst [vmem:[%s493] sm:$0xf] %v489
          %v495 = vunpack.c.l.bf16 %v489
          %v496 = vld [vmem:[#allocation3] sm:$0x1]
          %v497 = vrot.slane %v495, 4
          %v498 = vadd.f32 %v495, %v497
          %v499 = vrot.slane %v498, 2
          %v500 = vadd.f32 %v498, %v499
          %v501 = vrot.slane %v500, 1
          %v502 = vadd.f32 %v500, %v501
          %v503 = vadd.f32 %v496, %v502
          %504 = vst [vmem:[#allocation3] sm:$0x1] %v503
          %v505 = vld [vmem:[#allocation3 + $0x1] sm:$0x1]
          %v506 = vmul.f32 %v495, %v495
          %v507 = vrot.slane %v506, 4
          %v508 = vadd.f32 %v506, %v507
          %v509 = vrot.slane %v508, 2
          %v510 = vadd.f32 %v508, %v509
          %v511 = vrot.slane %v510, 1
          %v512 = vadd.f32 %v510, %v511
          %v513 = vadd.f32 %v505, %v512
          %514 = vst [vmem:[#allocation3 + $0x1] sm:$0x1] %v513
        $region40: #{seedbase2_forward.1} parent=35 // pred_fallthru
          _
        %p515 = scmp.eq.s32.totalorder %s22, 1
        // Predicated region
        $region45: #{seedbase2_forward.1} parent=35 // pred_check
          %p516 = pneg %p515
        $region46: #{seedbase2_forward.1} parent=35 // pred_check_branch
          %518 = sbr.rel (%p516) target = $region48
        $region47: #{seedbase2_forward.1} parent=35 // pred_region
          %p519 = scmp.eq.s32.totalorder %s23, 0
          // Predicated region
          $region49: #{seedbase2_forward.1} parent=47 // pred_check
            %p520 = pneg %p519
          $region50: #{seedbase2_forward.1} parent=47 // pred_check_branch
            %522 = sbr.rel (%p520) target = $region52
          $region51: #{seedbase2_forward.1} parent=47 // pred_region
            %v523 = vld [vmem:[#allocation3] sm:$0x1]
            %v524 = vmul.f32 %v523, 0.125
            %v525 = vld [vmem:[#allocation3 + $0x1] sm:$0x1]
            %v526 = vmul.f32 %v525, 0.125
            %v527 = vmul.f32 %v524, %v524
            %v528 = vsub.f32 %v526, %v527
            %v529 = vmax.f32 %v528, 0.0
            %v530 = vld [vmem:[%s3] sm:$0x1]
            %v531 = vadd.f32 %v529, 1e-05
            %v532 = vrsqrt.pop %v531
            %v533 = vmul.f32 %v530, %v532
            %534 = vst [vmem:[#allocation3 + $0x4] sm:$0x1] %v533
            %v535 = vld [vmem:[%s3 + $0x1] sm:$0x1]
            %v536 = vmul.f32 %v524, %v533
            %v537 = vsub.f32 %v535, %v536
            %538 = vst [vmem:[#allocation3 + $0x5] sm:$0x1] %v537
          $region52: #{seedbase2_forward.1} parent=47 // pred_fallthru
            _
          %s539 = sshra.s32 %s229, 3
          %s540 = sand.u32 %s229, 7
          %s541 = smul.addr %s539, 4
          %s542 = scalar_lea.vmem [#allocation2], %s541
          %v543 = vld [vmem:[%s542] sm:$0xf]
          %v544 = vunpack.c.l.bf16 %v543
          %v545 = vld [vmem:[#allocation3 + $0x4] sm:$0x1]
          %v546 = vlaneseq
          %v547 = vshrl.u32 %v546, 7
          %v548 = vsub.s32 0, %v547
          %v549 = vrot.slane %v545, %v548
          %v550 = vmul.f32 %v544, %v549
          %v551 = vld [vmem:[#allocation3 + $0x5] sm:$0x1]
          %v552 = vlaneseq
          %v553 = vshrl.u32 %v552, 7
          %v554 = vsub.s32 0, %v553
          %v555 = vrot.slane %v551, %v554
          %v556 = vadd.f32 %v550, %v555
          %v557 = vmax.f32 %v556, 0.0
          %v558 = vpack.c.bf16 %v557, %v557
          %v559 = vld [vmem:[%s2] sm:$0xf]
          %v560 = vld [vmem:[%s2 + $0x4] sm:$0xf]
          %v561 = vld [vmem:[%s2 + $0x8] sm:$0xf]
          %v562 = vld [vmem:[%s2 + $0xc] sm:$0xf]
          %v563 = vld [vmem:[%s2 + $0x10] sm:$0xf]
          %v564 = vld [vmem:[%s2 + $0x14] sm:$0xf]
          %v565 = vld [vmem:[%s2 + $0x18] sm:$0xf]
          %v566 = vld [vmem:[%s2 + $0x1c] sm:$0xf]
          %v567 = vld [vmem:[%s2 + $0x20] sm:$0xf]
          %v568 = vld [vmem:[%s2 + $0x24] sm:$0xf]
          %v569 = vld [vmem:[%s2 + $0x28] sm:$0xf]
          %v570 = vld [vmem:[%s2 + $0x2c] sm:$0xf]
          %v571 = vld [vmem:[%s2 + $0x30] sm:$0xf]
          %v572 = vld [vmem:[%s2 + $0x34] sm:$0xf]
          %v573 = vld [vmem:[%s2 + $0x38] sm:$0xf]
          %v574 = vld [vmem:[%s2 + $0x3c] sm:$0xf]
          %v591 = vunpack.c.l.b16 %v559
          %v592 = vunpack.c.l.b16 %v560
          %v593 = vunpack.c.l.b16 %v561
          %v594 = vunpack.c.l.b16 %v562
          %v595 = vunpack.c.l.b16 %v563
          %v596 = vunpack.c.l.b16 %v564
          %v597 = vunpack.c.l.b16 %v565
          %v598 = vunpack.c.l.b16 %v566
          %v599 = vunpack.c.l.b16 %v567
          %v600 = vunpack.c.l.b16 %v568
          %v601 = vunpack.c.l.b16 %v569
          %v602 = vunpack.c.l.b16 %v570
          %v603 = vunpack.c.l.b16 %v571
          %v604 = vunpack.c.l.b16 %v572
          %v605 = vunpack.c.l.b16 %v573
          %v606 = vunpack.c.l.b16 %v574
          %v607 = vpack.c.b16 %v592, %v591
          %v608 = vpack.c.b16 %v594, %v593
          %v609 = vpack.c.b16 %v596, %v595
          %v610 = vpack.c.b16 %v598, %v597
          %v611 = vpack.c.b16 %v600, %v599
          %v612 = vpack.c.b16 %v602, %v601
          %v613 = vpack.c.b16 %v604, %v603
          %v614 = vpack.c.b16 %v606, %v605
          %623 = vmatprep.subr.bf16.mxu0 0
          %624 = vmatpush1.bf16.msra.mxu0 %v607
          %625 = vmatprep.subr.bf16.mxu0 0
          %626 = vmatpush1.bf16.msra.mxu0 %v608
          %627 = vmatprep.subr.bf16.mxu0 0
          %628 = vmatpush1.bf16.msra.mxu0 %v609
          %629 = vmatprep.subr.bf16.mxu0 0
          %630 = vmatpush1.bf16.msra.mxu0 %v610
          %631 = vmatprep.subr.bf16.mxu0 0
          %632 = vmatpush1.bf16.msra.mxu0 %v611
          %633 = vmatprep.subr.bf16.mxu0 0
          %634 = vmatpush1.bf16.msra.mxu0 %v612
          %635 = vmatprep.subr.bf16.mxu0 0
          %636 = vmatpush1.bf16.msra.mxu0 %v613
          %637 = vmatprep.subr.bf16.mxu0 0
          %638 = vmatpush1.bf16.msra.mxu0 %v614
          %639 = vmatprep.subr.bf16.mxu0 0
          %640 = vmatpush1.bf16.msra.mxu0 0
          %641 = vmatprep.subr.bf16.mxu0 0
          %642 = vmatpush1.bf16.msra.mxu0 0
          %643 = vmatprep.subr.bf16.mxu0 0
          %644 = vmatpush1.bf16.msra.mxu0 0
          %645 = vmatprep.subr.bf16.mxu0 0
          %646 = vmatpush1.bf16.msra.mxu0 0
          %647 = vmatprep.subr.bf16.mxu0 0
          %648 = vmatpush1.bf16.msra.mxu0 0
          %649 = vmatprep.subr.bf16.mxu0 0
          %650 = vmatpush1.bf16.msra.mxu0 0
          %651 = vmatprep.subr.bf16.mxu0 0
          %652 = vmatpush1.bf16.msra.mxu0 0
          %653 = vmatprep.subr.bf16.mxu0 0
          %654 = vmatpush1.bf16.msra.mxu0 0
          %655 = vmatprep.mubr.bf16.mxu0 0
          %656 = vmatmul.mubr.bf16.gmra.mrb[0].mxu0 %v558
          %v657 = vpop.f32.mrb[0].mxu0
          %v658 = vadd.f32 0.0, %v657
          %v659 = vpop.f32.mrb[0].mxu0
          %v660 = vpop.f32.mrb[0].mxu0
          %v661 = vpop.f32.mrb[0].mxu0
          %662 = vdwg.mxu0
          %v663 = vld [vmem:[#allocation3 + $0x2] sm:$0x1]
          %v664 = vrot.slane %v658, 4
          %v665 = vadd.f32 %v658, %v664
          %v666 = vrot.slane %v665, 2
          %v667 = vadd.f32 %v665, %v666
          %v668 = vrot.slane %v667, 1
          %v669 = vadd.f32 %v667, %v668
          %v670 = vadd.f32 %v663, %v669
          %671 = vst [vmem:[#allocation3 + $0x2] sm:$0x1] %v670
          %v672 = vld [vmem:[#allocation3 + $0x3] sm:$0x1]
          %v673 = vmul.f32 %v658, %v658
          %v674 = vrot.slane %v673, 4
          %v675 = vadd.f32 %v673, %v674
          %v676 = vrot.slane %v675, 2
          %v677 = vadd.f32 %v675, %v676
          %v678 = vrot.slane %v677, 1
          %v679 = vadd.f32 %v677, %v678
          %v680 = vadd.f32 %v672, %v679
          %681 = vst [vmem:[#allocation3 + $0x3] sm:$0x1] %v680
        $region48: #{seedbase2_forward.1} parent=35 // pred_fallthru
          _
        %p682 = scmp.eq.s32.totalorder %s22, 2
        // Predicated region
        $region53: #{seedbase2_forward.1} parent=35 // pred_check
          %p683 = pneg %p682
        $region54: #{seedbase2_forward.1} parent=35 // pred_check_branch
          %685 = sbr.rel (%p683) target = $region56
        $region55: #{seedbase2_forward.1} parent=35 // pred_region
          %p686 = scmp.eq.s32.totalorder %s23, 0
          // Predicated region
          $region57: #{seedbase2_forward.1} parent=55 // pred_check
            %p687 = pneg %p686
          $region58: #{seedbase2_forward.1} parent=55 // pred_check_branch
            %689 = sbr.rel (%p687) target = $region60
          $region59: #{seedbase2_forward.1} parent=55 // pred_region
            %v690 = vld [vmem:[#allocation3 + $0x2] sm:$0x1]
            %v691 = vmul.f32 %v690, 0.125
            %v692 = vld [vmem:[#allocation3 + $0x3] sm:$0x1]
            %v693 = vmul.f32 %v692, 0.125
            %v694 = vmul.f32 %v691, %v691
            %v695 = vsub.f32 %v693, %v694
            %v696 = vmax.f32 %v695, 0.0
            %v697 = vld [vmem:[%s3 + $0x2] sm:$0x1]
            %v698 = vadd.f32 %v696, 1e-05
            %v699 = vrsqrt.pop %v698
            %v700 = vmul.f32 %v697, %v699
            %701 = vst [vmem:[#allocation3 + $0x6] sm:$0x1] %v700
            %v702 = vld [vmem:[%s3 + $0x3] sm:$0x1]
            %v703 = vmul.f32 %v691, %v700
            %v704 = vsub.f32 %v702, %v703
            %705 = vst [vmem:[#allocation3 + $0x7] sm:$0x1] %v704
          $region60: #{seedbase2_forward.1} parent=55 // pred_fallthru
            _
          %s706 = sshra.s32 %s229, 3
          %s707 = sand.u32 %s229, 7
          %s708 = smul.addr %s706, 4
          %s709 = scalar_lea.vmem [#allocation2], %s708
          %v710 = vld [vmem:[%s709] sm:$0xf]
          %v711 = vunpack.c.l.bf16 %v710
          %v712 = vld [vmem:[#allocation3 + $0x4] sm:$0x1]
          %v713 = vlaneseq
          %v714 = vshrl.u32 %v713, 7
          %v715 = vsub.s32 0, %v714
          %v716 = vrot.slane %v712, %v715
          %v717 = vmul.f32 %v711, %v716
          %v718 = vld [vmem:[#allocation3 + $0x5] sm:$0x1]
          %v719 = vlaneseq
          %v720 = vshrl.u32 %v719, 7
          %v721 = vsub.s32 0, %v720
          %v722 = vrot.slane %v718, %v721
          %v723 = vadd.f32 %v717, %v722
          %v724 = vmax.f32 %v723, 0.0
          %v725 = vpack.c.bf16 %v724, %v724
          %v726 = vld [vmem:[%s2] sm:$0xf]
          %v727 = vld [vmem:[%s2 + $0x4] sm:$0xf]
          %v728 = vld [vmem:[%s2 + $0x8] sm:$0xf]
          %v729 = vld [vmem:[%s2 + $0xc] sm:$0xf]
          %v730 = vld [vmem:[%s2 + $0x10] sm:$0xf]
          %v731 = vld [vmem:[%s2 + $0x14] sm:$0xf]
          %v732 = vld [vmem:[%s2 + $0x18] sm:$0xf]
          %v733 = vld [vmem:[%s2 + $0x1c] sm:$0xf]
          %v734 = vld [vmem:[%s2 + $0x20] sm:$0xf]
          %v735 = vld [vmem:[%s2 + $0x24] sm:$0xf]
          %v736 = vld [vmem:[%s2 + $0x28] sm:$0xf]
          %v737 = vld [vmem:[%s2 + $0x2c] sm:$0xf]
          %v738 = vld [vmem:[%s2 + $0x30] sm:$0xf]
          %v739 = vld [vmem:[%s2 + $0x34] sm:$0xf]
          %v740 = vld [vmem:[%s2 + $0x38] sm:$0xf]
          %v741 = vld [vmem:[%s2 + $0x3c] sm:$0xf]
          %v758 = vunpack.c.l.b16 %v726
          %v759 = vunpack.c.l.b16 %v727
          %v760 = vunpack.c.l.b16 %v728
          %v761 = vunpack.c.l.b16 %v729
          %v762 = vunpack.c.l.b16 %v730
          %v763 = vunpack.c.l.b16 %v731
          %v764 = vunpack.c.l.b16 %v732
          %v765 = vunpack.c.l.b16 %v733
          %v766 = vunpack.c.l.b16 %v734
          %v767 = vunpack.c.l.b16 %v735
          %v768 = vunpack.c.l.b16 %v736
          %v769 = vunpack.c.l.b16 %v737
          %v770 = vunpack.c.l.b16 %v738
          %v771 = vunpack.c.l.b16 %v739
          %v772 = vunpack.c.l.b16 %v740
          %v773 = vunpack.c.l.b16 %v741
          %v774 = vpack.c.b16 %v759, %v758
          %v775 = vpack.c.b16 %v761, %v760
          %v776 = vpack.c.b16 %v763, %v762
          %v777 = vpack.c.b16 %v765, %v764
          %v778 = vpack.c.b16 %v767, %v766
          %v779 = vpack.c.b16 %v769, %v768
          %v780 = vpack.c.b16 %v771, %v770
          %v781 = vpack.c.b16 %v773, %v772
          %790 = vmatprep.subr.bf16.mxu0 0
          %791 = vmatpush1.bf16.msra.mxu0 %v774
          %792 = vmatprep.subr.bf16.mxu0 0
          %793 = vmatpush1.bf16.msra.mxu0 %v775
          %794 = vmatprep.subr.bf16.mxu0 0
          %795 = vmatpush1.bf16.msra.mxu0 %v776
          %796 = vmatprep.subr.bf16.mxu0 0
          %797 = vmatpush1.bf16.msra.mxu0 %v777
          %798 = vmatprep.subr.bf16.mxu0 0
          %799 = vmatpush1.bf16.msra.mxu0 %v778
          %800 = vmatprep.subr.bf16.mxu0 0
          %801 = vmatpush1.bf16.msra.mxu0 %v779
          %802 = vmatprep.subr.bf16.mxu0 0
          %803 = vmatpush1.bf16.msra.mxu0 %v780
          %804 = vmatprep.subr.bf16.mxu0 0
          %805 = vmatpush1.bf16.msra.mxu0 %v781
          %806 = vmatprep.subr.bf16.mxu0 0
          %807 = vmatpush1.bf16.msra.mxu0 0
          %808 = vmatprep.subr.bf16.mxu0 0
          %809 = vmatpush1.bf16.msra.mxu0 0
          %810 = vmatprep.subr.bf16.mxu0 0
          %811 = vmatpush1.bf16.msra.mxu0 0
          %812 = vmatprep.subr.bf16.mxu0 0
          %813 = vmatpush1.bf16.msra.mxu0 0
          %814 = vmatprep.subr.bf16.mxu0 0
          %815 = vmatpush1.bf16.msra.mxu0 0
          %816 = vmatprep.subr.bf16.mxu0 0
          %817 = vmatpush1.bf16.msra.mxu0 0
          %818 = vmatprep.subr.bf16.mxu0 0
          %819 = vmatpush1.bf16.msra.mxu0 0
          %820 = vmatprep.subr.bf16.mxu0 0
          %821 = vmatpush1.bf16.msra.mxu0 0
          %822 = vmatprep.mubr.bf16.mxu0 0
          %823 = vmatmul.mubr.bf16.gmra.mrb[0].mxu0 %v725
          %v824 = vpop.f32.mrb[0].mxu0
          %v825 = vadd.f32 0.0, %v824
          %v826 = vpop.f32.mrb[0].mxu0
          %v827 = vpop.f32.mrb[0].mxu0
          %v828 = vpop.f32.mrb[0].mxu0
          %829 = vdwg.mxu0
          %v830 = vld [vmem:[#allocation3 + $0x6] sm:$0x1]
          %v831 = vlaneseq
          %v832 = vshrl.u32 %v831, 7
          %v833 = vsub.s32 0, %v832
          %v834 = vrot.slane %v830, %v833
          %v835 = vmul.f32 %v825, %v834
          %v836 = vld [vmem:[#allocation3 + $0x7] sm:$0x1]
          %v837 = vlaneseq
          %v838 = vshrl.u32 %v837, 7
          %v839 = vsub.s32 0, %v838
          %v840 = vrot.slane %v836, %v839
          %v841 = vadd.f32 %v835, %v840
          %v842 = vmax.f32 %v841, 0.0
          %843 = vst [vmem:[%s216] sm:$0xff] %v842
        $region56: #{seedbase2_forward.1} parent=35 // pred_fallthru
          _
        %s844 = sand.u32 %s135, 1
        %s845 = scalar_lea.sflag [#allocation5], %s844
        %s846 = sand.u32 %s135, 1
        %s847 = smul.addr %s846, 8
        %s848 = scalar_lea.vmem [#allocation4], %s847
        // Predicated region
        $region61: #{seedbase2_forward.1} parent=35 // pred_check
          %p849 = pneg %p145
        $region62: #{seedbase2_forward.1} parent=35 // pred_check_branch
          %851 = sbr.rel (%p849) target = $region64
        $region63: #{seedbase2_forward.1} parent=35 // pred_region
          %p852 = scmp.eq.s32.totalorder %s22, 2
          %s853 = scalar_select %p852, %s23, 0
          %s855 = ssub.s32 128, 128
          %856 = vsyncadd %s845, %s855
          %s857 = smul.addr %s853, 128
          %s858 = scalar_lea.hbm %s4, %s857
          %s860 = sshll.u32 %s848, 4
          %s861 = int_to_ptr.vmem [resolvable:$true] %s860
          %863 = dma.vmem_to_hbm [thread:$0]  %s861, 128, %s858, %s845
        $region64: #{seedbase2_forward.1} parent=35 // pred_fallthru
          _
      $region36: #{seedbase2_forward.1} parent=5 // pred_fallthru
        _
      %p864 = scmp.le.s32.totalorder 2, %s13
      // Predicated region
      $region65: #{seedbase2_forward.1} parent=5 // pred_check
        %p865 = pneg %p864
      $region66: #{seedbase2_forward.1} parent=5 // pred_check_branch
        %867 = sbr.rel (%p865) target = $region68
      $region67: #{seedbase2_forward.1} parent=5 // pred_region
        %s868 = ssub.s32 %s13, 2
        // Predicated region
        $region69: #{seedbase2_forward.1} parent=67 // pred_check
          %p869 = pneg %p151
        $region70: #{seedbase2_forward.1} parent=67 // pred_check_branch
          %871 = sbr.rel (%p869) target = $region72
        $region71: #{seedbase2_forward.1} parent=67 // pred_region
          %s872 = sand.u32 %s136, 1
          %s873 = scalar_lea.sflag [#allocation5], %s872
          %s874 = sand.u32 %s136, 1
          %s875 = smul.addr %s874, 8
          %s876 = scalar_lea.vmem [#allocation4], %s875
          %877 = dma.done %s873, 128
        $region72: #{seedbase2_forward.1} parent=67 // pred_fallthru
          _
      $region68: #{seedbase2_forward.1} parent=5 // pred_fallthru
        _
    $region6: #{seedbase2_forward.1} parent=1 // loop_footer
      %s17 = sadd.s32 1, %s13
    $region7: #{seedbase2_forward.1} parent=1 // loop_footer_branch
      %12 = sbr.rel target = $region3
    $region8: #{seedbase2_forward.1} parent=1 // loop_exit
      _
    %878 = vsyncpa [#allocation5], 1
    %s879 = scalar_lea.sflag [#allocation5], 1
    %880 = vsyncpa %s879, 1

</llo_original>
